<compile_context>
chip_gen: v6e
topology: v6e:2x2x1
jax: 0.10.0
libtpu: 0.0.40
codegen_flags: <defaults>
</compile_context>

<pallas_src>
import functools

import jax
import jax.numpy as jnp
from jax.experimental import pallas as pl
from jax.experimental.pallas import tpu as pltpu

# Sizes implied by the module (training_data.npy is not available):
# TODO(synk): inputFeatures/outputValues come from training_data.npy; fixed here.
IN_FEATURES = 32    # inputFeatures
HIDDEN = 64
OUT_VALUES = 8      # outputValues


def _mlp_kernel(x_ref,
                w1_ref, b1_ref,
                w2_ref, b2_ref,
                w3_ref, b3_ref,
                w4_ref, b4_ref,
                out_ref):
    """Fused 4-layer MLP + log_softmax on one batch tile.

    x arrives f32 and is cast to bf16 in VMEM (a few VPU ops, hidden under the
    MXU work); all accumulation / bias / ReLU / log_softmax math is f32.
    """
    x = x_ref[...].astype(jnp.bfloat16)

    h = jnp.dot(x, w1_ref[...], preferred_element_type=jnp.float32)
    h = jnp.maximum(h + b1_ref[...], 0.0)

    h = jnp.dot(h.astype(jnp.bfloat16), w2_ref[...],
                preferred_element_type=jnp.float32)
    h = jnp.maximum(h + b2_ref[...], 0.0)

    h = jnp.dot(h.astype(jnp.bfloat16), w3_ref[...],
                preferred_element_type=jnp.float32)
    h = jnp.maximum(h + b3_ref[...], 0.0)

    logits = jnp.dot(h.astype(jnp.bfloat16), w4_ref[...],
                     preferred_element_type=jnp.float32) + b4_ref[...]

    # log_softmax over dim=1 (the class axis): max-shift + log-sum-exp in f32.
    m = jnp.max(logits, axis=-1, keepdims=True)
    shifted = logits - m
    lse = jnp.log(jnp.sum(jnp.exp(shifted), axis=-1, keepdims=True))
    # O=8 < 128 lanes -> masked partial store; negligible at these tile sizes.
    out_ref[...] = (shifted - lse).astype(out_ref.dtype)


def _pick_batch_tile(B, batch_tile):
    """Batch-tile policy (runs at trace time on Python ints).

    - B < 32: one whole-batch block (full-array BlockSpec, always legal).
    - otherwise: at least 2 balanced steps (feeds both v7x TensorCores; the
      extra grid step costs only ~0.35us on single-TC v5e/v6e), but never more
      steps than needed to keep each tile <= batch_tile rows.
    Tiles are multiples of 16 sublanes; the tail block (if any) is masked by
    Pallas, so no wrapper-side padding is needed.
    """
    if B < 32:
        return B
    n_steps = max(2, pl.cdiv(B, batch_tile))
    bt = 16 * pl.cdiv(pl.cdiv(B, n_steps), 16)
    return min(bt, B)


@functools.partial(jax.jit, static_argnames=("batch_tile",))
def net_forward(x, params, *, batch_tile=4096):
    """x: (B, IN_FEATURES) float32 -> (B, OUT_VALUES) float32 log-probs."""
    (w1, b1), (w2, b2), (w3, b3), (w4, b4) = params
    B, F = x.shape
    O = w4.shape[1]

    bt = _pick_batch_tile(B, batch_tile)
    grid = (pl.cdiv(B, bt),)

    def x_map(i):
        return (i, 0)

    def param_map(i):
        return (0, 0)

    # Weights/biases are full-array, constant-index blocks (resident across
    # the whole grid); weights are already bf16 (cast once at init time).
    in_specs = [
        pl.BlockSpec((bt, F), x_map),
        pl.BlockSpec(w1.shape, param_map), pl.BlockSpec(b1.shape, param_map),
        pl.BlockSpec(w2.shape, param_map), pl.BlockSpec(b2.shape, param_map),
        pl.BlockSpec(w3.shape, param_map), pl.BlockSpec(b3.shape, param_map),
        pl.BlockSpec(w4.shape, param_map), pl.BlockSpec(b4.shape, param_map),
    ]
    out_specs = pl.BlockSpec((bt, O), x_map)

    return pl.pallas_call(
        _mlp_kernel,
        out_shape=jax.ShapeDtypeStruct((B, O), jnp.float32),
        grid=grid,
        in_specs=in_specs,
        out_specs=out_specs,
        compiler_params=pltpu.CompilerParams(
            dimension_semantics=("parallel",),
            # Footprint is ~a few hundred KiB even at huge tiles; this limit
            # is generous headroom, not a tiling constraint.
            vmem_limit_bytes=32 * 1024 * 1024),
    )(x, w1, b1, w2, b2, w3, b3, w4, b4)


def init_params(key):
    """nn.Linear-style init (uniform +/- 1/sqrt(fan_in)); weights stored
    (in, out) and cast to bf16 ONCE here (no per-call cast in the forward).
    Biases stay f32 (f32 bias/ReLU math in-kernel)."""
    dims = [(IN_FEATURES, HIDDEN), (HIDDEN, HIDDEN),
            (HIDDEN, HIDDEN), (HIDDEN, OUT_VALUES)]
    params = []
    for (fan_in, fan_out) in dims:
        key, kw, kb = jax.random.split(key, 3)
        bound = 1.0 / jnp.sqrt(fan_in)
        w = jax.random.uniform(kw, (fan_in, fan_out), jnp.float32, -bound, bound)
        b = jax.random.uniform(kb, (1, fan_out), jnp.float32, -bound, bound)
        params.append((w.astype(jnp.bfloat16), b))
    return params


def reference_forward(x, params):
    """Pure-JAX reference mirroring the kernel's bf16-in / f32-accumulate math."""
    h = x.astype(jnp.bfloat16)
    for i, (w, b) in enumerate(params):
        h = jnp.dot(h, w, preferred_element_type=jnp.float32) + b
        if i < len(params) - 1:
            h = jnp.maximum(h, 0.0).astype(jnp.bfloat16)
    return jax.nn.log_softmax(h, axis=1)


if __name__ == "__main__":
    key = jax.random.PRNGKey(0)
    key, kx, kx_small = jax.random.split(key, 3)
    params = init_params(key)

    # Tiled path: B=256 -> 2 balanced 128-row tiles, grid=(2,).
    B = 256
    x = jax.random.normal(kx, (B, IN_FEATURES), jnp.float32)
    out = jax.block_until_ready(net_forward(x, params))
    ref = reference_forward(x, params)
    assert out.shape == (B, OUT_VALUES)
    assert jnp.allclose(out, ref, atol=2e-2, rtol=2e-2), \
        float(jnp.max(jnp.abs(out - ref)))
    assert jnp.allclose(jnp.sum(jnp.exp(out), axis=1), 1.0, atol=1e-2)

    # Deployment-style tiny batch: B=8 -> single whole-batch block, grid=(1,).
    x_small = jax.random.normal(kx_small, (8, IN_FEATURES), jnp.float32)
    out_small = jax.block_until_ready(net_forward(x_small, params))
    ref_small = reference_forward(x_small, params)
    assert out_small.shape == (8, OUT_VALUES)
    assert jnp.allclose(out_small, ref_small, atol=2e-2, rtol=2e-2), \
        float(jnp.max(jnp.abs(out_small - ref_small)))

    print("KERNEL_OK")
</pallas_src>

<mosaic_0001>
module attributes {stable_mosaic.version = 11 : i64} {
  func.func @_mlp_kernel(%arg0: i32, %arg1: memref<128x32xf32, #tpu.memory_space<vmem>>, %arg2: memref<32x64xbf16, #tpu.memory_space<vmem>>, %arg3: memref<1x64xf32, #tpu.memory_space<vmem>>, %arg4: memref<64x64xbf16, #tpu.memory_space<vmem>>, %arg5: memref<1x64xf32, #tpu.memory_space<vmem>>, %arg6: memref<64x64xbf16, #tpu.memory_space<vmem>>, %arg7: memref<1x64xf32, #tpu.memory_space<vmem>>, %arg8: memref<64x8xbf16, #tpu.memory_space<vmem>>, %arg9: memref<1x8xf32, #tpu.memory_space<vmem>>, %arg10: memref<128x8xf32, #tpu.memory_space<vmem>>) attributes {dimension_semantics = [#tpu.dimension_semantics<parallel>], iteration_bounds = array<i64: 2>, scalar_prefetch = 0 : i64, scratch_operands = 0 : i64, tpu.core_type = #tpu.core_type<tc>, window_params = [{transform_indices = @transform_0, window_bounds = array<i64: 128, 32>}, {pipeline_mode = #tpu.pipeline_mode<synchronous>, transform_indices = @transform_1, window_bounds = array<i64: 32, 64>}, {pipeline_mode = #tpu.pipeline_mode<synchronous>, transform_indices = @transform_2, window_bounds = array<i64: 1, 64>}, {pipeline_mode = #tpu.pipeline_mode<synchronous>, transform_indices = @transform_3, window_bounds = array<i64: 64, 64>}, {pipeline_mode = #tpu.pipeline_mode<synchronous>, transform_indices = @transform_4, window_bounds = array<i64: 1, 64>}, {pipeline_mode = #tpu.pipeline_mode<synchronous>, transform_indices = @transform_5, window_bounds = array<i64: 64, 64>}, {pipeline_mode = #tpu.pipeline_mode<synchronous>, transform_indices = @transform_6, window_bounds = array<i64: 1, 64>}, {pipeline_mode = #tpu.pipeline_mode<synchronous>, transform_indices = @transform_7, window_bounds = array<i64: 64, 8>}, {pipeline_mode = #tpu.pipeline_mode<synchronous>, transform_indices = @transform_8, window_bounds = array<i64: 1, 8>}, {transform_indices = @transform_9, window_bounds = array<i64: 128, 8>}]} {
    %c0 = arith.constant 0 : index
    %c0_0 = arith.constant 0 : index
    %0 = vector.load %arg1[%c0, %c0_0] : memref<128x32xf32, #tpu.memory_space<vmem>>, vector<128x32xf32>
    %1 = arith.truncf %0 : vector<128x32xf32> to vector<128x32xbf16>
    %c0_1 = arith.constant 0 : index
    %c0_2 = arith.constant 0 : index
    %2 = vector.load %arg2[%c0_1, %c0_2] : memref<32x64xbf16, #tpu.memory_space<vmem>>, vector<32x64xbf16>
    %cst = arith.constant dense<0.000000e+00> : vector<128x64xf32>
    %3 = tpu.matmul %1, %2, %cst {dimension_numbers = #tpu.dot_dimension_numbers<[1], [0], [0], [1], [0, 0, 1, 1], [], []>} : vector<128x32xbf16>, vector<32x64xbf16>, vector<128x64xf32> -> vector<128x64xf32>
    %c0_3 = arith.constant 0 : index
    %c0_4 = arith.constant 0 : index
    %4 = vector.load %arg3[%c0_3, %c0_4] : memref<1x64xf32, #tpu.memory_space<vmem>>, vector<1x64xf32>
    %5 = vector.broadcast %4 : vector<1x64xf32> to vector<128x64xf32>
    %6 = arith.addf %3, %5 : vector<128x64xf32>
    %cst_5 = arith.constant 0.000000e+00 : f32
    %7 = vector.broadcast %cst_5 : f32 to vector<128x64xf32>
    %8 = arith.maximumf %6, %7 : vector<128x64xf32>
    %9 = arith.truncf %8 : vector<128x64xf32> to vector<128x64xbf16>
    %c0_6 = arith.constant 0 : index
    %c0_7 = arith.constant 0 : index
    %10 = vector.load %arg4[%c0_6, %c0_7] : memref<64x64xbf16, #tpu.memory_space<vmem>>, vector<64x64xbf16>
    %cst_8 = arith.constant dense<0.000000e+00> : vector<128x64xf32>
    %11 = tpu.matmul %9, %10, %cst_8 {dimension_numbers = #tpu.dot_dimension_numbers<[1], [0], [0], [1], [0, 0, 1, 1], [], []>} : vector<128x64xbf16>, vector<64x64xbf16>, vector<128x64xf32> -> vector<128x64xf32>
    %c0_9 = arith.constant 0 : index
    %c0_10 = arith.constant 0 : index
    %12 = vector.load %arg5[%c0_9, %c0_10] : memref<1x64xf32, #tpu.memory_space<vmem>>, vector<1x64xf32>
    %13 = vector.broadcast %12 : vector<1x64xf32> to vector<128x64xf32>
    %14 = arith.addf %11, %13 : vector<128x64xf32>
    %cst_11 = arith.constant 0.000000e+00 : f32
    %15 = vector.broadcast %cst_11 : f32 to vector<128x64xf32>
    %16 = arith.maximumf %14, %15 : vector<128x64xf32>
    %17 = arith.truncf %16 : vector<128x64xf32> to vector<128x64xbf16>
    %c0_12 = arith.constant 0 : index
    %c0_13 = arith.constant 0 : index
    %18 = vector.load %arg6[%c0_12, %c0_13] : memref<64x64xbf16, #tpu.memory_space<vmem>>, vector<64x64xbf16>
    %cst_14 = arith.constant dense<0.000000e+00> : vector<128x64xf32>
    %19 = tpu.matmul %17, %18, %cst_14 {dimension_numbers = #tpu.dot_dimension_numbers<[1], [0], [0], [1], [0, 0, 1, 1], [], []>} : vector<128x64xbf16>, vector<64x64xbf16>, vector<128x64xf32> -> vector<128x64xf32>
    %c0_15 = arith.constant 0 : index
    %c0_16 = arith.constant 0 : index
    %20 = vector.load %arg7[%c0_15, %c0_16] : memref<1x64xf32, #tpu.memory_space<vmem>>, vector<1x64xf32>
    %21 = vector.broadcast %20 : vector<1x64xf32> to vector<128x64xf32>
    %22 = arith.addf %19, %21 : vector<128x64xf32>
    %cst_17 = arith.constant 0.000000e+00 : f32
    %23 = vector.broadcast %cst_17 : f32 to vector<128x64xf32>
    %24 = arith.maximumf %22, %23 : vector<128x64xf32>
    %25 = arith.truncf %24 : vector<128x64xf32> to vector<128x64xbf16>
    %c0_18 = arith.constant 0 : index
    %c0_19 = arith.constant 0 : index
    %26 = vector.load %arg8[%c0_18, %c0_19] : memref<64x8xbf16, #tpu.memory_space<vmem>>, vector<64x8xbf16>
    %cst_20 = arith.constant dense<0.000000e+00> : vector<128x8xf32>
    %27 = tpu.matmul %25, %26, %cst_20 {dimension_numbers = #tpu.dot_dimension_numbers<[1], [0], [0], [1], [0, 0, 1, 1], [], []>} : vector<128x64xbf16>, vector<64x8xbf16>, vector<128x8xf32> -> vector<128x8xf32>
    %c0_21 = arith.constant 0 : index
    %c0_22 = arith.constant 0 : index
    %28 = vector.load %arg9[%c0_21, %c0_22] : memref<1x8xf32, #tpu.memory_space<vmem>>, vector<1x8xf32>
    %29 = vector.broadcast %28 : vector<1x8xf32> to vector<128x8xf32>
    %30 = arith.addf %27, %29 : vector<128x8xf32>
    %cst_23 = arith.constant dense<0xFF800000> : vector<128xf32>
    %31 = vector.multi_reduction <maximumf>, %30, %cst_23 [1] : vector<128x8xf32> to vector<128xf32>
    %32 = vector.shape_cast %31 : vector<128xf32> to vector<128x1xf32>
    %33 = vector.broadcast %32 : vector<128x1xf32> to vector<128x8xf32>
    %34 = arith.subf %30, %33 : vector<128x8xf32>
    %35 = math.exp %34 : vector<128x8xf32>
    %cst_24 = arith.constant dense<0.000000e+00> : vector<128xf32>
    %36 = vector.multi_reduction <add>, %35, %cst_24 [1] : vector<128x8xf32> to vector<128xf32>
    %37 = vector.shape_cast %36 : vector<128xf32> to vector<128x1xf32>
    %38 = math.log %37 : vector<128x1xf32>
    %39 = vector.broadcast %38 : vector<128x1xf32> to vector<128x8xf32>
    %40 = arith.subf %34, %39 : vector<128x8xf32>
    %c0_25 = arith.constant 0 : index
    %c0_26 = arith.constant 0 : index
    %41 = vector.load %arg10[%c0_25, %c0_26] : memref<128x8xf32, #tpu.memory_space<vmem>>, vector<128x8xf32>
    tpu.vector_store %arg10[%c0_25, %c0_26], %40 {strides = array<i32>} : memref<128x8xf32, #tpu.memory_space<vmem>>, vector<128x8xf32>,
    return
  }
  func.func @transform_0(%arg0: i32) -> (i32, i32) {
    %c0_i32 = arith.constant 0 : i32
    %c0_i32_0 = arith.constant 0 : i32
    return %arg0, %c0_i32 : i32, i32
  }
  func.func @transform_1(%arg0: i32) -> (i32, i32) {
    %c0_i32 = arith.constant 0 : i32
    %c0_i32_0 = arith.constant 0 : i32
    %c0_i32_1 = arith.constant 0 : i32
    return %c0_i32, %c0_i32_0 : i32, i32
  }
  func.func @transform_2(%arg0: i32) -> (i32, i32) {
    %c0_i32 = arith.constant 0 : i32
    %c0_i32_0 = arith.constant 0 : i32
    %c0_i32_1 = arith.constant 0 : i32
    return %c0_i32, %c0_i32_0 : i32, i32
  }
  func.func @transform_3(%arg0: i32) -> (i32, i32) {
    %c0_i32 = arith.constant 0 : i32
    %c0_i32_0 = arith.constant 0 : i32
    %c0_i32_1 = arith.constant 0 : i32
    return %c0_i32, %c0_i32_0 : i32, i32
  }
  func.func @transform_4(%arg0: i32) -> (i32, i32) {
    %c0_i32 = arith.constant 0 : i32
    %c0_i32_0 = arith.constant 0 : i32
    %c0_i32_1 = arith.constant 0 : i32
    return %c0_i32, %c0_i32_0 : i32, i32
  }
  func.func @transform_5(%arg0: i32) -> (i32, i32) {
    %c0_i32 = arith.constant 0 : i32
    %c0_i32_0 = arith.constant 0 : i32
    %c0_i32_1 = arith.constant 0 : i32
    return %c0_i32, %c0_i32_0 : i32, i32
  }
  func.func @transform_6(%arg0: i32) -> (i32, i32) {
    %c0_i32 = arith.constant 0 : i32
    %c0_i32_0 = arith.constant 0 : i32
    %c0_i32_1 = arith.constant 0 : i32
    return %c0_i32, %c0_i32_0 : i32, i32
  }
  func.func @transform_7(%arg0: i32) -> (i32, i32) {
    %c0_i32 = arith.constant 0 : i32
    %c0_i32_0 = arith.constant 0 : i32
    %c0_i32_1 = arith.constant 0 : i32
    return %c0_i32, %c0_i32_0 : i32, i32
  }
  func.func @transform_8(%arg0: i32) -> (i32, i32) {
    %c0_i32 = arith.constant 0 : i32
    %c0_i32_0 = arith.constant 0 : i32
    %c0_i32_1 = arith.constant 0 : i32
    return %c0_i32, %c0_i32_0 : i32, i32
  }
  func.func @transform_9(%arg0: i32) -> (i32, i32) {
    %c0_i32 = arith.constant 0 : i32
    %c0_i32_0 = arith.constant 0 : i32
    return %arg0, %c0_i32 : i32, i32
  }
}

</mosaic_0001>

<llo_original>
// kernel: net_forward.1
$region0: #{net_forward.1}
  #allocation0 [shape = 'u32[]', space=smem, size = 0x4, offset = 0x4, fixed_abs, tag = 'smem constant byte address 0x4 - core index']
  #allocation1 [shape = 'u32[144,128]{1,0:T(1,128)}', space=vmem, size = 0x12000, scoped, tag = 'internal scratch']
  %s0 = inlined_call_operand.vmem [shape: f32[256,32], index: 0, kind: input, shape index: {}]
  %s1 = inlined_call_operand.vmem [shape: bf16[32,64], index: 1, kind: input, shape index: {}]
  %s2 = inlined_call_operand.vmem [shape: f32[1,64], index: 2, kind: input, shape index: {}]
  %s3 = inlined_call_operand.vmem [shape: bf16[64,64], index: 3, kind: input, shape index: {}]
  %s4 = inlined_call_operand.vmem [shape: f32[1,64], index: 4, kind: input, shape index: {}]
  %s5 = inlined_call_operand.vmem [shape: bf16[64,64], index: 5, kind: input, shape index: {}]
  %s6 = inlined_call_operand.vmem [shape: f32[1,64], index: 6, kind: input, shape index: {}]
  %s7 = inlined_call_operand.vmem [shape: bf16[64,8], index: 7, kind: input, shape index: {}]
  %s8 = inlined_call_operand.vmem [shape: f32[1,8], index: 8, kind: input, shape index: {}]
  %s9 = inlined_call_operand.vmem [shape: f32[256,8], index: 9, kind: output, shape index: {}]
  %s10 = sld [smem:[#allocation0]]
  $region69: #{net_forward.1} parent=0
    _
  %s12 = ssub.s32 1, %s10
  %s13 = scalar_select 0, %s12, %s10
  loop: start=0, step=1, limit=4
  $region2: #{net_forward.1} parent=0 // loop_pre_header
    _
  $region3: #{net_forward.1} parent=0 // loop_header
    %s15 = sphi 0, %s19
    %p16 = scmp.ge.s32.totalorder %s15, 4
    %s25 = sphi 0, %s27
    %s28 = sphi 0, %s25
    %s29 = sphi 0, %s28
    %s45 = sphi 0, %s29
    %s49 = sphi 0, %s49
    %s51 = sphi 0, %s49
    %s52 = sphi 0, %s51
    %s66 = sphi 0, %s52
    %s70 = sphi 0, %s70
    %s72 = sphi 0, %s70
    %s73 = sphi 0, %s72
    %s87 = sphi 0, %s73
    %s91 = sphi 0, %s91
    %s93 = sphi 0, %s91
    %s94 = sphi 0, %s93
    %s108 = sphi 0, %s94
    %s112 = sphi 0, %s112
    %s114 = sphi 0, %s112
    %s115 = sphi 0, %s114
    %s129 = sphi 0, %s115
    %s133 = sphi 0, %s133
    %s135 = sphi 0, %s133
    %s136 = sphi 0, %s135
    %s150 = sphi 0, %s136
    %s154 = sphi 0, %s154
    %s156 = sphi 0, %s154
    %s157 = sphi 0, %s156
    %s171 = sphi 0, %s157
    %s175 = sphi 0, %s175
    %s177 = sphi 0, %s175
    %s178 = sphi 0, %s177
    %s192 = sphi 0, %s178
    %s196 = sphi 0, %s196
    %s198 = sphi 0, %s196
    %s199 = sphi 0, %s198
    %s213 = sphi 0, %s199
    %s219 = sphi 0, %s221
    %s222 = sphi 0, %s219
    %s223 = sphi 0, %s222
    %s239 = sphi 0, %s223
  $region4: #{net_forward.1} parent=0 // loop_header_branch
    %18 = sbr.rel (%p16) target = $region8
  $region5: #{net_forward.1} parent=0 // loop_body
    %s20 = ssub.s32 %s15, 1
    %s21 = ssub.s32 %s15, 2
    %s22 = sadd.s32 %s15, 1
    %s23 = ssub.s32 %s15, %s22
    %p24 = scmp.eq.s32.totalorder %s23, 0
    %s26 = sadd.s32 %s25, 1
    %s27 = scalar_select %p24, %s25, %s26
    %p30 = pneg %p24
    %p31 = scmp.eq.s32.totalorder %s15, 1
    %p32 = por %p30, %p31
    %p33 = scmp.ne.s32.totalorder %s25, %s28
    %p34 = scmp.eq.s32.totalorder %s15, 0
    %p35 = por %p33, %p34
    %p36 = scmp.ne.s32.totalorder %s25, %s28
    %p37 = scmp.eq.s32.totalorder %s20, 1
    %p38 = por %p36, %p37
    %p39 = scmp.ne.s32.totalorder %s28, %s29
    %p40 = scmp.eq.s32.totalorder %s20, 0
    %p41 = por %p39, %p40
    %p42 = scmp.ne.s32.totalorder %s28, %s29
    %p43 = scmp.eq.s32.totalorder %s21, 1
    %p44 = por %p42, %p43
    %p46 = scmp.ne.s32.totalorder %s29, %s45
    %p47 = scmp.eq.s32.totalorder %s21, 0
    %p48 = por %p46, %p47
    %s50 = sadd.s32 %s49, 1
    %p53 = scmp.eq.s32.totalorder %s15, 1
    %p54 = scmp.ne.s32.totalorder %s49, %s51
    %p55 = scmp.eq.s32.totalorder %s15, 0
    %p56 = por %p54, %p55
    %p57 = scmp.ne.s32.totalorder %s49, %s51
    %p58 = scmp.eq.s32.totalorder %s20, 1
    %p59 = por %p57, %p58
    %p60 = scmp.ne.s32.totalorder %s51, %s52
    %p61 = scmp.eq.s32.totalorder %s20, 0
    %p62 = por %p60, %p61
    %p63 = scmp.ne.s32.totalorder %s51, %s52
    %p64 = scmp.eq.s32.totalorder %s21, 1
    %p65 = por %p63, %p64
    %p67 = scmp.ne.s32.totalorder %s52, %s66
    %p68 = scmp.eq.s32.totalorder %s21, 0
    %p69 = por %p67, %p68
    %s71 = sadd.s32 %s70, 1
    %p74 = scmp.eq.s32.totalorder %s15, 1
    %p75 = scmp.ne.s32.totalorder %s70, %s72
    %p76 = scmp.eq.s32.totalorder %s15, 0
    %p77 = por %p75, %p76
    %p78 = scmp.ne.s32.totalorder %s70, %s72
    %p79 = scmp.eq.s32.totalorder %s20, 1
    %p80 = por %p78, %p79
    %p81 = scmp.ne.s32.totalorder %s72, %s73
    %p82 = scmp.eq.s32.totalorder %s20, 0
    %p83 = por %p81, %p82
    %p84 = scmp.ne.s32.totalorder %s72, %s73
    %p85 = scmp.eq.s32.totalorder %s21, 1
    %p86 = por %p84, %p85
    %p88 = scmp.ne.s32.totalorder %s73, %s87
    %p89 = scmp.eq.s32.totalorder %s21, 0
    %p90 = por %p88, %p89
    %s92 = sadd.s32 %s91, 1
    %p95 = scmp.eq.s32.totalorder %s15, 1
    %p96 = scmp.ne.s32.totalorder %s91, %s93
    %p97 = scmp.eq.s32.totalorder %s15, 0
    %p98 = por %p96, %p97
    %p99 = scmp.ne.s32.totalorder %s91, %s93
    %p100 = scmp.eq.s32.totalorder %s20, 1
    %p101 = por %p99, %p100
    %p102 = scmp.ne.s32.totalorder %s93, %s94
    %p103 = scmp.eq.s32.totalorder %s20, 0
    %p104 = por %p102, %p103
    %p105 = scmp.ne.s32.totalorder %s93, %s94
    %p106 = scmp.eq.s32.totalorder %s21, 1
    %p107 = por %p105, %p106
    %p109 = scmp.ne.s32.totalorder %s94, %s108
    %p110 = scmp.eq.s32.totalorder %s21, 0
    %p111 = por %p109, %p110
    %s113 = sadd.s32 %s112, 1
    %p116 = scmp.eq.s32.totalorder %s15, 1
    %p117 = scmp.ne.s32.totalorder %s112, %s114
    %p118 = scmp.eq.s32.totalorder %s15, 0
    %p119 = por %p117, %p118
    %p120 = scmp.ne.s32.totalorder %s112, %s114
    %p121 = scmp.eq.s32.totalorder %s20, 1
    %p122 = por %p120, %p121
    %p123 = scmp.ne.s32.totalorder %s114, %s115
    %p124 = scmp.eq.s32.totalorder %s20, 0
    %p125 = por %p123, %p124
    %p126 = scmp.ne.s32.totalorder %s114, %s115
    %p127 = scmp.eq.s32.totalorder %s21, 1
    %p128 = por %p126, %p127
    %p130 = scmp.ne.s32.totalorder %s115, %s129
    %p131 = scmp.eq.s32.totalorder %s21, 0
    %p132 = por %p130, %p131
    %s134 = sadd.s32 %s133, 1
    %p137 = scmp.eq.s32.totalorder %s15, 1
    %p138 = scmp.ne.s32.totalorder %s133, %s135
    %p139 = scmp.eq.s32.totalorder %s15, 0
    %p140 = por %p138, %p139
    %p141 = scmp.ne.s32.totalorder %s133, %s135
    %p142 = scmp.eq.s32.totalorder %s20, 1
    %p143 = por %p141, %p142
    %p144 = scmp.ne.s32.totalorder %s135, %s136
    %p145 = scmp.eq.s32.totalorder %s20, 0
    %p146 = por %p144, %p145
    %p147 = scmp.ne.s32.totalorder %s135, %s136
    %p148 = scmp.eq.s32.totalorder %s21, 1
    %p149 = por %p147, %p148
    %p151 = scmp.ne.s32.totalorder %s136, %s150
    %p152 = scmp.eq.s32.totalorder %s21, 0
    %p153 = por %p151, %p152
    %s155 = sadd.s32 %s154, 1
    %p158 = scmp.eq.s32.totalorder %s15, 1
    %p159 = scmp.ne.s32.totalorder %s154, %s156
    %p160 = scmp.eq.s32.totalorder %s15, 0
    %p161 = por %p159, %p160
    %p162 = scmp.ne.s32.totalorder %s154, %s156
    %p163 = scmp.eq.s32.totalorder %s20, 1
    %p164 = por %p162, %p163
    %p165 = scmp.ne.s32.totalorder %s156, %s157
    %p166 = scmp.eq.s32.totalorder %s20, 0
    %p167 = por %p165, %p166
    %p168 = scmp.ne.s32.totalorder %s156, %s157
    %p169 = scmp.eq.s32.totalorder %s21, 1
    %p170 = por %p168, %p169
    %p172 = scmp.ne.s32.totalorder %s157, %s171
    %p173 = scmp.eq.s32.totalorder %s21, 0
    %p174 = por %p172, %p173
    %s176 = sadd.s32 %s175, 1
    %p179 = scmp.eq.s32.totalorder %s15, 1
    %p180 = scmp.ne.s32.totalorder %s175, %s177
    %p181 = scmp.eq.s32.totalorder %s15, 0
    %p182 = por %p180, %p181
    %p183 = scmp.ne.s32.totalorder %s175, %s177
    %p184 = scmp.eq.s32.totalorder %s20, 1
    %p185 = por %p183, %p184
    %p186 = scmp.ne.s32.totalorder %s177, %s178
    %p187 = scmp.eq.s32.totalorder %s20, 0
    %p188 = por %p186, %p187
    %p189 = scmp.ne.s32.totalorder %s177, %s178
    %p190 = scmp.eq.s32.totalorder %s21, 1
    %p191 = por %p189, %p190
    %p193 = scmp.ne.s32.totalorder %s178, %s192
    %p194 = scmp.eq.s32.totalorder %s21, 0
    %p195 = por %p193, %p194
    %s197 = sadd.s32 %s196, 1
    %p200 = scmp.eq.s32.totalorder %s15, 1
    %p201 = scmp.ne.s32.totalorder %s196, %s198
    %p202 = scmp.eq.s32.totalorder %s15, 0
    %p203 = por %p201, %p202
    %p204 = scmp.ne.s32.totalorder %s196, %s198
    %p205 = scmp.eq.s32.totalorder %s20, 1
    %p206 = por %p204, %p205
    %p207 = scmp.ne.s32.totalorder %s198, %s199
    %p208 = scmp.eq.s32.totalorder %s20, 0
    %p209 = por %p207, %p208
    %p210 = scmp.ne.s32.totalorder %s198, %s199
    %p211 = scmp.eq.s32.totalorder %s21, 1
    %p212 = por %p210, %p211
    %p214 = scmp.ne.s32.totalorder %s199, %s213
    %p215 = scmp.eq.s32.totalorder %s21, 0
    %p216 = por %p214, %p215
    %s217 = ssub.s32 %s15, %s22
    %p218 = scmp.eq.s32.totalorder %s217, 0
    %s220 = sadd.s32 %s219, 1
    %s221 = scalar_select %p218, %s219, %s220
    %p224 = pneg %p218
    %p225 = scmp.eq.s32.totalorder %s15, 1
    %p226 = por %p224, %p225
    %p227 = scmp.ne.s32.totalorder %s219, %s222
    %p228 = scmp.eq.s32.totalorder %s15, 0
    %p229 = por %p227, %p228
    %p230 = scmp.ne.s32.totalorder %s219, %s222
    %p231 = scmp.eq.s32.totalorder %s20, 1
    %p232 = por %p230, %p231
    %p233 = scmp.ne.s32.totalorder %s222, %s223
    %p234 = scmp.eq.s32.totalorder %s20, 0
    %p235 = por %p233, %p234
    %p236 = scmp.ne.s32.totalorder %s222, %s223
    %p237 = scmp.eq.s32.totalorder %s21, 1
    %p238 = por %p236, %p237
    %p240 = scmp.ne.s32.totalorder %s223, %s239
    %p241 = scmp.eq.s32.totalorder %s21, 0
    %p242 = por %p240, %p241
    %p243 = scmp.le.s32.totalorder 1, %s15
    %p244 = scmp.lt.s32.totalorder %s15, 3
    %p245 = pnand %p243, %p244
    %p246 = pneg %p245
    // Predicated region
    $region9: #{net_forward.1} parent=5 // pred_check
      _
    $region10: #{net_forward.1} parent=5 // pred_check_branch
      %248 = sbr.rel (%p245) target = $region12
    $region11: #{net_forward.1} parent=5 // pred_region
      %s249 = ssub.s32 %s15, 1
      // Predicated region
      $region13: #{net_forward.1} parent=11 // pred_check
        %p250 = pneg %p62
      $region14: #{net_forward.1} parent=11 // pred_check_branch
        %252 = sbr.rel (%p250) target = $region16
      $region15: #{net_forward.1} parent=11 // pred_region
        _
      $region16: #{net_forward.1} parent=11 // pred_fallthru
        _
      // Predicated region
      $region17: #{net_forward.1} parent=11 // pred_check
        %p253 = pneg %p83
      $region18: #{net_forward.1} parent=11 // pred_check_branch
        %255 = sbr.rel (%p253) target = $region20
      $region19: #{net_forward.1} parent=11 // pred_region
        _
      $region20: #{net_forward.1} parent=11 // pred_fallthru
        _
      // Predicated region
      $region21: #{net_forward.1} parent=11 // pred_check
        %p256 = pneg %p104
      $region22: #{net_forward.1} parent=11 // pred_check_branch
        %258 = sbr.rel (%p256) target = $region24
      $region23: #{net_forward.1} parent=11 // pred_region
        _
      $region24: #{net_forward.1} parent=11 // pred_fallthru
        _
      // Predicated region
      $region25: #{net_forward.1} parent=11 // pred_check
        %p259 = pneg %p125
      $region26: #{net_forward.1} parent=11 // pred_check_branch
        %261 = sbr.rel (%p259) target = $region28
      $region27: #{net_forward.1} parent=11 // pred_region
        _
      $region28: #{net_forward.1} parent=11 // pred_fallthru
        _
      // Predicated region
      $region29: #{net_forward.1} parent=11 // pred_check
        %p262 = pneg %p146
      $region30: #{net_forward.1} parent=11 // pred_check_branch
        %264 = sbr.rel (%p262) target = $region32
      $region31: #{net_forward.1} parent=11 // pred_region
        _
      $region32: #{net_forward.1} parent=11 // pred_fallthru
        _
      // Predicated region
      $region33: #{net_forward.1} parent=11 // pred_check
        %p265 = pneg %p167
      $region34: #{net_forward.1} parent=11 // pred_check_branch
        %267 = sbr.rel (%p265) target = $region36
      $region35: #{net_forward.1} parent=11 // pred_region
        _
      $region36: #{net_forward.1} parent=11 // pred_fallthru
        _
      // Predicated region
      $region37: #{net_forward.1} parent=11 // pred_check
        %p268 = pneg %p188
      $region38: #{net_forward.1} parent=11 // pred_check_branch
        %270 = sbr.rel (%p268) target = $region40
      $region39: #{net_forward.1} parent=11 // pred_region
        _
      $region40: #{net_forward.1} parent=11 // pred_fallthru
        _
      // Predicated region
      $region41: #{net_forward.1} parent=11 // pred_check
        %p271 = pneg %p209
      $region42: #{net_forward.1} parent=11 // pred_check_branch
        %273 = sbr.rel (%p271) target = $region44
      $region43: #{net_forward.1} parent=11 // pred_region
        _
      $region44: #{net_forward.1} parent=11 // pred_fallthru
        _
    $region12: #{net_forward.1} parent=5 // pred_fallthru
      _
    %p274 = scmp.lt.s32.totalorder %s15, 2
    // Predicated region
    $region45: #{net_forward.1} parent=5 // pred_check
      %p275 = pneg %p274
    $region46: #{net_forward.1} parent=5 // pred_check_branch
      %277 = sbr.rel (%p275) target = $region48
    $region47: #{net_forward.1} parent=5 // pred_region
      // Predicated region
      $region49: #{net_forward.1} parent=47 // pred_check
        %p278 = pneg %p35
      $region50: #{net_forward.1} parent=47 // pred_check_branch
        %280 = sbr.rel (%p278) target = $region52
      $region51: #{net_forward.1} parent=47 // pred_region
        %s281 = smul.u32 16, %s15
        %p282 = scmp.lt.s32.totalorder %s281, 31
        %s283 = scalar_select %p282, %s281, 31
        %s284 = smul.addr %s283, 8
        %s285 = scalar_lea.vmem %s0, %s284
        %s286 = smul.u32 16, %s15
      $region52: #{net_forward.1} parent=47 // pred_fallthru
        _
    $region48: #{net_forward.1} parent=5 // pred_fallthru
      _
    %p287 = scmp.le.s32.totalorder 1, %s15
    %p288 = scmp.lt.s32.totalorder %s15, 3
    %p289 = pnand %p287, %p288
    %p290 = pneg %p289
    // Predicated region
    $region53: #{net_forward.1} parent=5 // pred_check
      _
    $region54: #{net_forward.1} parent=5 // pred_check_branch
      %292 = sbr.rel (%p289) target = $region56
    $region55: #{net_forward.1} parent=5 // pred_region
      %s293 = ssub.s32 %s15, 1
      %s294 = smul.u32 16, %s20
      %p295 = scmp.lt.s32.totalorder %s294, 31
      %s296 = scalar_select %p295, %s294, 31
      %s297 = smul.addr %s296, 8
      %s298 = scalar_lea.vmem %s0, %s297
      %p299 = pneg %p41
      %p300 = pneg %p38
      %p301 = pneg %p62
      %p302 = pneg %p59
      %p303 = pneg %p83
      %p304 = pneg %p80
      %p305 = pneg %p104
      %p306 = pneg %p101
      %p307 = pneg %p125
      %p308 = pneg %p122
      %p309 = pneg %p146
      %p310 = pneg %p143
      %p311 = pneg %p167
      %p312 = pneg %p164
      %p313 = pneg %p188
      %p314 = pneg %p185
      %p315 = pneg %p209
      %p316 = pneg %p206
      %p317 = pneg %p235
      %p318 = pneg %p232
      %s319 = smul.u32 16, %s20
      %p320 = scmp.lt.s32.totalorder %s319, 31
      %s321 = scalar_select %p320, %s319, 31
      %s322 = smul.addr %s321, 8
      %s323 = scalar_lea.vmem %s9, %s322
      %s324 = smul.u32 16, %s20
      %p325 = scmp.lt.s32.totalorder %s324, 31
      %s326 = scalar_select %p325, %s324, 31
      %s327 = smul.addr %s326, 8
      %s328 = scalar_lea.vmem %s0, %s327
      %s329 = smul.u32 16, %s20
      %s330 = smul.u32 16, %s20
      %p331 = scmp.lt.s32.totalorder %s330, 31
      %s332 = scalar_select %p331, %s330, 31
      %s333 = smul.addr %s332, 8
      %s334 = scalar_lea.vmem %s9, %s333
      %s335 = smul.u32 16, %s20
      %v337 = vld [vmem:[%s328] sm:$0xff]
      %v338 = vld [vmem:[%s328 + $0x8] sm:$0xff]
      %v339 = vld [vmem:[%s328 + $0x10] sm:$0xff]
      %v340 = vld [vmem:[%s328 + $0x18] sm:$0xff]
      %v341 = vld [vmem:[%s328 + $0x20] sm:$0xff]
      %v342 = vld [vmem:[%s328 + $0x28] sm:$0xff]
      %v343 = vld [vmem:[%s328 + $0x30] sm:$0xff]
      %v344 = vld [vmem:[%s328 + $0x38] sm:$0xff]
      %v345 = vld [vmem:[%s328 + $0x40] sm:$0xff]
      %v346 = vld [vmem:[%s328 + $0x48] sm:$0xff]
      %v347 = vld [vmem:[%s328 + $0x50] sm:$0xff]
      %v348 = vld [vmem:[%s328 + $0x58] sm:$0xff]
      %v349 = vld [vmem:[%s328 + $0x60] sm:$0xff]
      %v350 = vld [vmem:[%s328 + $0x68] sm:$0xff]
      %v351 = vld [vmem:[%s328 + $0x70] sm:$0xff]
      %v352 = vld [vmem:[%s328 + $0x78] sm:$0xff]
      %v353 = vpack.c.bf16 %v338, %v337
      %v354 = vpack.c.bf16 %v340, %v339
      %v355 = vpack.c.bf16 %v342, %v341
      %v356 = vpack.c.bf16 %v344, %v343
      %v357 = vpack.c.bf16 %v346, %v345
      %v358 = vpack.c.bf16 %v348, %v347
      %v359 = vpack.c.bf16 %v350, %v349
      %v360 = vpack.c.bf16 %v352, %v351
      %v361 = vld [vmem:[%s1] sm:$0xf]
      %v362 = vld [vmem:[%s1 + $0x4] sm:$0xf]
      %v363 = vld [vmem:[%s1 + $0x8] sm:$0xf]
      %v364 = vld [vmem:[%s1 + $0xc] sm:$0xf]
      %v365 = vld [vmem:[%s2] sm:$0x1]
      %v367 = vlaneseq
      %v368 = vshrl.u32 %v367, 7
      %v369 = vsub.s32 0, %v368
      %v370 = vrot.slane %v365, %v369
      %v376 = vunpack.c.l.b16 %v361
      %v377 = vunpack.c.l.b16 %v362
      %v378 = vunpack.c.l.b16 %v363
      %v379 = vunpack.c.l.b16 %v364
      %v380 = vpack.c.b16 %v377, %v376
      %v381 = vpack.c.b16 %v379, %v378
      %vm384 = vcmask 261120
      %v386 = vsel %vm384, %v353, 0
      %v389 = vsel %vm384, %v354, 0
      %v392 = vsel %vm384, %v355, 0
      %v395 = vsel %vm384, %v356, 0
      %v398 = vsel %vm384, %v357, 0
      %v401 = vsel %vm384, %v358, 0
      %v404 = vsel %vm384, %v359, 0
      %v407 = vsel %vm384, %v360, 0
      %409 = vmatprep.subr.bf16.mxu0 0
      %410 = vmatpush1.bf16.msra.mxu0 0
      %411 = vmatprep.subr.bf16.mxu0 0
      %412 = vmatpush1.bf16.msra.mxu0 0
      %413 = vmatprep.subr.bf16.mxu0 0
      %414 = vmatpush1.bf16.msra.mxu0 0
      %415 = vmatprep.subr.bf16.mxu0 0
      %416 = vmatpush1.bf16.msra.mxu0 0
      %417 = vmatprep.subr.bf16.mxu0 0
      %418 = vmatpush1.bf16.msra.mxu0 0
      %419 = vmatprep.subr.bf16.mxu0 0
      %420 = vmatpush1.bf16.msra.mxu0 0
      %421 = vmatprep.subr.bf16.mxu0 0
      %422 = vmatpush1.bf16.msra.mxu0 %v381
      %423 = vmatprep.subr.bf16.mxu0 0
      %424 = vmatpush1.bf16.msra.mxu0 %v380
      %425 = vmatprep.subr.bf16.mxu0 0
      %426 = vmatpush2.bf16.msra.mxu0 0
      %427 = vmatprep.subr.bf16.mxu0 0
      %428 = vmatpush2.bf16.msra.mxu0 0
      %429 = vmatprep.subr.bf16.mxu0 0
      %430 = vmatpush2.bf16.msra.mxu0 0
      %431 = vmatprep.subr.bf16.mxu0 0
      %432 = vmatpush2.bf16.msra.mxu0 0
      %433 = vmatprep.subr.bf16.mxu0 0
      %434 = vmatpush2.bf16.msra.mxu0 0
      %435 = vmatprep.subr.bf16.mxu0 0
      %436 = vmatpush2.bf16.msra.mxu0 0
      %437 = vmatprep.subr.bf16.mxu0 0
      %438 = vmatpush2.bf16.msra.mxu0 0
      %439 = vmatprep.subr.bf16.mxu0 0
      %440 = vmatpush2.bf16.msra.mxu0 0
      %441 = vmatprep.mubr.bf16.mxu0 0
      %442 = vmatmul.mubr.bf16.gmra.mxu0 %v386
      %v443 = vpop.f32.mrf.mxu0
      %v444 = vadd.f32 %v370, %v443
      %v445 = vpop.f32.mrf.mxu0
      %v446 = vpop.f32.mrf.mxu0
      %v447 = vadd.f32 %v370, %v446
      %v448 = vpop.f32.mrf.mxu0
      %449 = vmatprep.mubr.bf16.mxu0 0
      %450 = vmatmul.mubr.bf16.gmra.mxu0 %v389
      %v451 = vpop.f32.mrf.mxu0
      %v452 = vadd.f32 %v370, %v451
      %v453 = vpop.f32.mrf.mxu0
      %v454 = vpop.f32.mrf.mxu0
      %v455 = vadd.f32 %v370, %v454
      %v456 = vpop.f32.mrf.mxu0
      %457 = vmatprep.mubr.bf16.mxu0 0
      %458 = vmatmul.mubr.bf16.gmra.mxu0 %v392
      %v459 = vpop.f32.mrf.mxu0
      %v460 = vadd.f32 %v370, %v459
      %v461 = vpop.f32.mrf.mxu0
      %v462 = vpop.f32.mrf.mxu0
      %v463 = vadd.f32 %v370, %v462
      %v464 = vpop.f32.mrf.mxu0
      %465 = vmatprep.mubr.bf16.mxu0 0
      %466 = vmatmul.mubr.bf16.gmra.mxu0 %v395
      %v467 = vpop.f32.mrf.mxu0
      %v468 = vadd.f32 %v370, %v467
      %v469 = vpop.f32.mrf.mxu0
      %v470 = vpop.f32.mrf.mxu0
      %v471 = vadd.f32 %v370, %v470
      %v472 = vpop.f32.mrf.mxu0
      %473 = vmatprep.mubr.bf16.mxu0 0
      %474 = vmatmul.mubr.bf16.gmra.mxu0 %v398
      %v475 = vpop.f32.mrf.mxu0
      %v476 = vadd.f32 %v370, %v475
      %v477 = vpop.f32.mrf.mxu0
      %v478 = vpop.f32.mrf.mxu0
      %v479 = vadd.f32 %v370, %v478
      %v480 = vpop.f32.mrf.mxu0
      %481 = vmatprep.mubr.bf16.mxu0 0
      %482 = vmatmul.mubr.bf16.gmra.mxu0 %v401
      %v483 = vpop.f32.mrf.mxu0
      %v484 = vadd.f32 %v370, %v483
      %v485 = vpop.f32.mrf.mxu0
      %v486 = vpop.f32.mrf.mxu0
      %v487 = vadd.f32 %v370, %v486
      %v488 = vpop.f32.mrf.mxu0
      %489 = vmatprep.mubr.bf16.mxu0 0
      %490 = vmatmul.mubr.bf16.gmra.mxu0 %v404
      %v491 = vpop.f32.mrf.mxu0
      %v492 = vadd.f32 %v370, %v491
      %v493 = vpop.f32.mrf.mxu0
      %v494 = vpop.f32.mrf.mxu0
      %v495 = vadd.f32 %v370, %v494
      %v496 = vpop.f32.mrf.mxu0
      %497 = vmatprep.mubr.bf16.mxu0 0
      %498 = vmatmul.mubr.bf16.gmra.mxu0 %v407
      %v499 = vpop.f32.mrf.mxu0
      %v500 = vadd.f32 %v370, %v499
      %v501 = vpop.f32.mrf.mxu0
      %v502 = vpop.f32.mrf.mxu0
      %v503 = vadd.f32 %v370, %v502
      %v504 = vpop.f32.mrf.mxu0
      %505 = vdwg.mxu0
      %v506 = vmax.f32 %v444, 0.0
      %v507 = vmax.f32 %v447, 0.0
      %v508 = vmax.f32 %v452, 0.0
      %v509 = vmax.f32 %v455, 0.0
      %v510 = vmax.f32 %v460, 0.0
      %v511 = vmax.f32 %v463, 0.0
      %v512 = vmax.f32 %v468, 0.0
      %v513 = vmax.f32 %v471, 0.0
      %v514 = vmax.f32 %v476, 0.0
      %v515 = vmax.f32 %v479, 0.0
      %v516 = vmax.f32 %v484, 0.0
      %v517 = vmax.f32 %v487, 0.0
      %v518 = vmax.f32 %v492, 0.0
      %v519 = vmax.f32 %v495, 0.0
      %v520 = vmax.f32 %v500, 0.0
      %v521 = vmax.f32 %v503, 0.0
      %v522 = vpack.c.bf16 %v507, %v506
      %v523 = vpack.c.bf16 %v509, %v508
      %v524 = vpack.c.bf16 %v511, %v510
      %v525 = vpack.c.bf16 %v513, %v512
      %v526 = vpack.c.bf16 %v515, %v514
      %v527 = vpack.c.bf16 %v517, %v516
      %v528 = vpack.c.bf16 %v519, %v518
      %v529 = vpack.c.bf16 %v521, %v520
      %v530 = vld [vmem:[%s3] sm:$0xf]
      %v531 = vld [vmem:[%s3 + $0x4] sm:$0xf]
      %v532 = vld [vmem:[%s3 + $0x8] sm:$0xf]
      %v533 = vld [vmem:[%s3 + $0xc] sm:$0xf]
      %v534 = vld [vmem:[%s3 + $0x10] sm:$0xf]
      %v535 = vld [vmem:[%s3 + $0x14] sm:$0xf]
      %v536 = vld [vmem:[%s3 + $0x18] sm:$0xf]
      %v537 = vld [vmem:[%s3 + $0x1c] sm:$0xf]
      %v538 = vld [vmem:[%s4] sm:$0x1]
      %v540 = vlaneseq
      %v541 = vshrl.u32 %v540, 7
      %v542 = vsub.s32 0, %v541
      %v543 = vrot.slane %v538, %v542
      %v553 = vunpack.c.l.b16 %v530
      %v554 = vunpack.c.l.b16 %v531
      %v555 = vunpack.c.l.b16 %v532
      %v556 = vunpack.c.l.b16 %v533
      %v557 = vunpack.c.l.b16 %v534
      %v558 = vunpack.c.l.b16 %v535
      %v559 = vunpack.c.l.b16 %v536
      %v560 = vunpack.c.l.b16 %v537
      %v561 = vpack.c.b16 %v554, %v553
      %v562 = vpack.c.b16 %v556, %v555
      %v563 = vpack.c.b16 %v558, %v557
      %v564 = vpack.c.b16 %v560, %v559
      %vm569 = vcmask 523264
      %v571 = vsel %vm569, %v522, 0
      %v574 = vsel %vm569, %v523, 0
      %v577 = vsel %vm569, %v524, 0
      %v580 = vsel %vm569, %v525, 0
      %v583 = vsel %vm569, %v526, 0
      %v586 = vsel %vm569, %v527, 0
      %v589 = vsel %vm569, %v528, 0
      %v592 = vsel %vm569, %v529, 0
      %594 = vmatprep.subr.bf16.mxu0 0
      %595 = vmatpush1.bf16.msra.mxu0 0
      %596 = vmatprep.subr.bf16.mxu0 0
      %597 = vmatpush1.bf16.msra.mxu0 0
      %598 = vmatprep.subr.bf16.mxu0 0
      %599 = vmatpush1.bf16.msra.mxu0 0
      %600 = vmatprep.subr.bf16.mxu0 0
      %601 = vmatpush1.bf16.msra.mxu0 0
      %602 = vmatprep.subr.bf16.mxu0 0
      %603 = vmatpush1.bf16.msra.mxu0 %v564
      %604 = vmatprep.subr.bf16.mxu0 0
      %605 = vmatpush1.bf16.msra.mxu0 %v563
      %606 = vmatprep.subr.bf16.mxu0 0
      %607 = vmatpush1.bf16.msra.mxu0 %v562
      %608 = vmatprep.subr.bf16.mxu0 0
      %609 = vmatpush1.bf16.msra.mxu0 %v561
      %610 = vmatprep.subr.bf16.mxu0 0
      %611 = vmatpush2.bf16.msra.mxu0 0
      %612 = vmatprep.subr.bf16.mxu0 0
      %613 = vmatpush2.bf16.msra.mxu0 0
      %614 = vmatprep.subr.bf16.mxu0 0
      %615 = vmatpush2.bf16.msra.mxu0 0
      %616 = vmatprep.subr.bf16.mxu0 0
      %617 = vmatpush2.bf16.msra.mxu0 0
      %618 = vmatprep.subr.bf16.mxu0 0
      %619 = vmatpush2.bf16.msra.mxu0 0
      %620 = vmatprep.subr.bf16.mxu0 0
      %621 = vmatpush2.bf16.msra.mxu0 0
      %622 = vmatprep.subr.bf16.mxu0 0
      %623 = vmatpush2.bf16.msra.mxu0 0
      %624 = vmatprep.subr.bf16.mxu0 0
      %625 = vmatpush2.bf16.msra.mxu0 0
      %626 = vmatprep.mubr.bf16.mxu0 0
      %627 = vmatmul.mubr.bf16.gmra.mxu0 %v571
      %v628 = vpop.f32.mrf.mxu0
      %v629 = vadd.f32 %v543, %v628
      %v630 = vpop.f32.mrf.mxu0
      %v631 = vpop.f32.mrf.mxu0
      %v632 = vadd.f32 %v543, %v631
      %v633 = vpop.f32.mrf.mxu0
      %634 = vmatprep.mubr.bf16.mxu0 0
      %635 = vmatmul.mubr.bf16.gmra.mxu0 %v574
      %v636 = vpop.f32.mrf.mxu0
      %v637 = vadd.f32 %v543, %v636
      %v638 = vpop.f32.mrf.mxu0
      %v639 = vpop.f32.mrf.mxu0
      %v640 = vadd.f32 %v543, %v639
      %v641 = vpop.f32.mrf.mxu0
      %642 = vmatprep.mubr.bf16.mxu0 0
      %643 = vmatmul.mubr.bf16.gmra.mxu0 %v577
      %v644 = vpop.f32.mrf.mxu0
      %v645 = vadd.f32 %v543, %v644
      %v646 = vpop.f32.mrf.mxu0
      %v647 = vpop.f32.mrf.mxu0
      %v648 = vadd.f32 %v543, %v647
      %v649 = vpop.f32.mrf.mxu0
      %650 = vmatprep.mubr.bf16.mxu0 0
      %651 = vmatmul.mubr.bf16.gmra.mxu0 %v580
      %v652 = vpop.f32.mrf.mxu0
      %v653 = vadd.f32 %v543, %v652
      %v654 = vpop.f32.mrf.mxu0
      %v655 = vpop.f32.mrf.mxu0
      %v656 = vadd.f32 %v543, %v655
      %v657 = vpop.f32.mrf.mxu0
      %658 = vmatprep.mubr.bf16.mxu0 0
      %659 = vmatmul.mubr.bf16.gmra.mxu0 %v583
      %v660 = vpop.f32.mrf.mxu0
      %v661 = vadd.f32 %v543, %v660
      %v662 = vpop.f32.mrf.mxu0
      %v663 = vpop.f32.mrf.mxu0
      %v664 = vadd.f32 %v543, %v663
      %v665 = vpop.f32.mrf.mxu0
      %666 = vmatprep.mubr.bf16.mxu0 0
      %667 = vmatmul.mubr.bf16.gmra.mxu0 %v586
      %v668 = vpop.f32.mrf.mxu0
      %v669 = vadd.f32 %v543, %v668
      %v670 = vpop.f32.mrf.mxu0
      %v671 = vpop.f32.mrf.mxu0
      %v672 = vadd.f32 %v543, %v671
      %v673 = vpop.f32.mrf.mxu0
      %674 = vmatprep.mubr.bf16.mxu0 0
      %675 = vmatmul.mubr.bf16.gmra.mxu0 %v589
      %v676 = vpop.f32.mrf.mxu0
      %v677 = vadd.f32 %v543, %v676
      %v678 = vpop.f32.mrf.mxu0
      %v679 = vpop.f32.mrf.mxu0
      %v680 = vadd.f32 %v543, %v679
      %v681 = vpop.f32.mrf.mxu0
      %682 = vmatprep.mubr.bf16.mxu0 0
      %683 = vmatmul.mubr.bf16.gmra.mxu0 %v592
      %v684 = vpop.f32.mrf.mxu0
      %v685 = vadd.f32 %v543, %v684
      %v686 = vpop.f32.mrf.mxu0
      %v687 = vpop.f32.mrf.mxu0
      %v688 = vadd.f32 %v543, %v687
      %v689 = vpop.f32.mrf.mxu0
      %690 = vdwg.mxu0
      %v691 = vmax.f32 %v629, 0.0
      %v692 = vmax.f32 %v632, 0.0
      %v693 = vmax.f32 %v637, 0.0
      %v694 = vmax.f32 %v640, 0.0
      %v695 = vmax.f32 %v645, 0.0
      %v696 = vmax.f32 %v648, 0.0
      %v697 = vmax.f32 %v653, 0.0
      %v698 = vmax.f32 %v656, 0.0
      %v699 = vmax.f32 %v661, 0.0
      %v700 = vmax.f32 %v664, 0.0
      %v701 = vmax.f32 %v669, 0.0
      %v702 = vmax.f32 %v672, 0.0
      %v703 = vmax.f32 %v677, 0.0
      %v704 = vmax.f32 %v680, 0.0
      %v705 = vmax.f32 %v685, 0.0
      %v706 = vmax.f32 %v688, 0.0
      %v707 = vpack.c.bf16 %v692, %v691
      %v708 = vpack.c.bf16 %v694, %v693
      %v709 = vpack.c.bf16 %v696, %v695
      %v710 = vpack.c.bf16 %v698, %v697
      %v711 = vpack.c.bf16 %v700, %v699
      %v712 = vpack.c.bf16 %v702, %v701
      %v713 = vpack.c.bf16 %v704, %v703
      %v714 = vpack.c.bf16 %v706, %v705
      %v715 = vld [vmem:[%s5] sm:$0xf]
      %v716 = vld [vmem:[%s5 + $0x4] sm:$0xf]
      %v717 = vld [vmem:[%s5 + $0x8] sm:$0xf]
      %v718 = vld [vmem:[%s5 + $0xc] sm:$0xf]
      %v719 = vld [vmem:[%s5 + $0x10] sm:$0xf]
      %v720 = vld [vmem:[%s5 + $0x14] sm:$0xf]
      %v721 = vld [vmem:[%s5 + $0x18] sm:$0xf]
      %v722 = vld [vmem:[%s5 + $0x1c] sm:$0xf]
      %v723 = vld [vmem:[%s6] sm:$0x1]
      %v725 = vlaneseq
      %v726 = vshrl.u32 %v725, 7
      %v727 = vsub.s32 0, %v726
      %v728 = vrot.slane %v723, %v727
      %v738 = vunpack.c.l.b16 %v715
      %v739 = vunpack.c.l.b16 %v716
      %v740 = vunpack.c.l.b16 %v717
      %v741 = vunpack.c.l.b16 %v718
      %v742 = vunpack.c.l.b16 %v719
      %v743 = vunpack.c.l.b16 %v720
      %v744 = vunpack.c.l.b16 %v721
      %v745 = vunpack.c.l.b16 %v722
      %v746 = vpack.c.b16 %v739, %v738
      %v747 = vpack.c.b16 %v741, %v740
      %v748 = vpack.c.b16 %v743, %v742
      %v749 = vpack.c.b16 %v745, %v744
      %v755 = vsel %vm569, %v707, 0
      %v758 = vsel %vm569, %v708, 0
      %v761 = vsel %vm569, %v709, 0
      %v764 = vsel %vm569, %v710, 0
      %v767 = vsel %vm569, %v711, 0
      %v770 = vsel %vm569, %v712, 0
      %v773 = vsel %vm569, %v713, 0
      %v776 = vsel %vm569, %v714, 0
      %778 = vmatprep.subr.bf16.mxu0 0
      %779 = vmatpush1.bf16.msra.mxu0 0
      %780 = vmatprep.subr.bf16.mxu0 0
      %781 = vmatpush1.bf16.msra.mxu0 0
      %782 = vmatprep.subr.bf16.mxu0 0
      %783 = vmatpush1.bf16.msra.mxu0 0
      %784 = vmatprep.subr.bf16.mxu0 0
      %785 = vmatpush1.bf16.msra.mxu0 0
      %786 = vmatprep.subr.bf16.mxu0 0
      %787 = vmatpush1.bf16.msra.mxu0 %v749
      %788 = vmatprep.subr.bf16.mxu0 0
      %789 = vmatpush1.bf16.msra.mxu0 %v748
      %790 = vmatprep.subr.bf16.mxu0 0
      %791 = vmatpush1.bf16.msra.mxu0 %v747
      %792 = vmatprep.subr.bf16.mxu0 0
      %793 = vmatpush1.bf16.msra.mxu0 %v746
      %794 = vmatprep.subr.bf16.mxu0 0
      %795 = vmatpush2.bf16.msra.mxu0 0
      %796 = vmatprep.subr.bf16.mxu0 0
      %797 = vmatpush2.bf16.msra.mxu0 0
      %798 = vmatprep.subr.bf16.mxu0 0
      %799 = vmatpush2.bf16.msra.mxu0 0
      %800 = vmatprep.subr.bf16.mxu0 0
      %801 = vmatpush2.bf16.msra.mxu0 0
      %802 = vmatprep.subr.bf16.mxu0 0
      %803 = vmatpush2.bf16.msra.mxu0 0
      %804 = vmatprep.subr.bf16.mxu0 0
      %805 = vmatpush2.bf16.msra.mxu0 0
      %806 = vmatprep.subr.bf16.mxu0 0
      %807 = vmatpush2.bf16.msra.mxu0 0
      %808 = vmatprep.subr.bf16.mxu0 0
      %809 = vmatpush2.bf16.msra.mxu0 0
      %810 = vmatprep.mubr.bf16.mxu0 0
      %811 = vmatmul.mubr.bf16.gmra.mxu0 %v755
      %v812 = vpop.f32.mrf.mxu0
      %v813 = vadd.f32 %v728, %v812
      %v814 = vpop.f32.mrf.mxu0
      %v815 = vpop.f32.mrf.mxu0
      %v816 = vadd.f32 %v728, %v815
      %v817 = vpop.f32.mrf.mxu0
      %818 = vmatprep.mubr.bf16.mxu0 0
      %819 = vmatmul.mubr.bf16.gmra.mxu0 %v758
      %v820 = vpop.f32.mrf.mxu0
      %v821 = vadd.f32 %v728, %v820
      %v822 = vpop.f32.mrf.mxu0
      %v823 = vpop.f32.mrf.mxu0
      %v824 = vadd.f32 %v728, %v823
      %v825 = vpop.f32.mrf.mxu0
      %826 = vmatprep.mubr.bf16.mxu0 0
      %827 = vmatmul.mubr.bf16.gmra.mxu0 %v761
      %v828 = vpop.f32.mrf.mxu0
      %v829 = vadd.f32 %v728, %v828
      %v830 = vpop.f32.mrf.mxu0
      %v831 = vpop.f32.mrf.mxu0
      %v832 = vadd.f32 %v728, %v831
      %v833 = vpop.f32.mrf.mxu0
      %834 = vmatprep.mubr.bf16.mxu0 0
      %835 = vmatmul.mubr.bf16.gmra.mxu0 %v764
      %v836 = vpop.f32.mrf.mxu0
      %v837 = vadd.f32 %v728, %v836
      %v838 = vpop.f32.mrf.mxu0
      %v839 = vpop.f32.mrf.mxu0
      %v840 = vadd.f32 %v728, %v839
      %v841 = vpop.f32.mrf.mxu0
      %842 = vmatprep.mubr.bf16.mxu0 0
      %843 = vmatmul.mubr.bf16.gmra.mxu0 %v767
      %v844 = vpop.f32.mrf.mxu0
      %v845 = vadd.f32 %v728, %v844
      %v846 = vpop.f32.mrf.mxu0
      %v847 = vpop.f32.mrf.mxu0
      %v848 = vadd.f32 %v728, %v847
      %v849 = vpop.f32.mrf.mxu0
      %850 = vmatprep.mubr.bf16.mxu0 0
      %851 = vmatmul.mubr.bf16.gmra.mxu0 %v770
      %v852 = vpop.f32.mrf.mxu0
      %v853 = vadd.f32 %v728, %v852
      %v854 = vpop.f32.mrf.mxu0
      %v855 = vpop.f32.mrf.mxu0
      %v856 = vadd.f32 %v728, %v855
      %v857 = vpop.f32.mrf.mxu0
      %858 = vmatprep.mubr.bf16.mxu0 0
      %859 = vmatmul.mubr.bf16.gmra.mxu0 %v773
      %v860 = vpop.f32.mrf.mxu0
      %v861 = vadd.f32 %v728, %v860
      %v862 = vpop.f32.mrf.mxu0
      %v863 = vpop.f32.mrf.mxu0
      %v864 = vadd.f32 %v728, %v863
      %v865 = vpop.f32.mrf.mxu0
      %866 = vmatprep.mubr.bf16.mxu0 0
      %867 = vmatmul.mubr.bf16.gmra.mxu0 %v776
      %v868 = vpop.f32.mrf.mxu0
      %v869 = vadd.f32 %v728, %v868
      %v870 = vpop.f32.mrf.mxu0
      %v871 = vpop.f32.mrf.mxu0
      %v872 = vadd.f32 %v728, %v871
      %v873 = vpop.f32.mrf.mxu0
      %874 = vdwg.mxu0
      %v875 = vmax.f32 %v813, 0.0
      %v876 = vmax.f32 %v816, 0.0
      %v877 = vmax.f32 %v821, 0.0
      %v878 = vmax.f32 %v824, 0.0
      %v879 = vmax.f32 %v829, 0.0
      %v880 = vmax.f32 %v832, 0.0
      %v881 = vmax.f32 %v837, 0.0
      %v882 = vmax.f32 %v840, 0.0
      %v883 = vmax.f32 %v845, 0.0
      %v884 = vmax.f32 %v848, 0.0
      %v885 = vmax.f32 %v853, 0.0
      %v886 = vmax.f32 %v856, 0.0
      %v887 = vmax.f32 %v861, 0.0
      %v888 = vmax.f32 %v864, 0.0
      %v889 = vmax.f32 %v869, 0.0
      %v890 = vmax.f32 %v872, 0.0
      %v891 = vpack.c.bf16 %v876, %v875
      %v892 = vpack.c.bf16 %v878, %v877
      %v893 = vpack.c.bf16 %v880, %v879
      %v894 = vpack.c.bf16 %v882, %v881
      %v895 = vpack.c.bf16 %v884, %v883
      %v896 = vpack.c.bf16 %v886, %v885
      %v897 = vpack.c.bf16 %v888, %v887
      %v898 = vpack.c.bf16 %v890, %v889
      %v899 = vld [vmem:[%s7] sm:$0xf]
      %v900 = vld [vmem:[%s7 + $0x4] sm:$0xf]
      %v901 = vld [vmem:[%s7 + $0x8] sm:$0xf]
      %v902 = vld [vmem:[%s7 + $0xc] sm:$0xf]
      %v903 = vld [vmem:[%s7 + $0x10] sm:$0xf]
      %v904 = vld [vmem:[%s7 + $0x14] sm:$0xf]
      %v905 = vld [vmem:[%s7 + $0x18] sm:$0xf]
      %v906 = vld [vmem:[%s7 + $0x1c] sm:$0xf]
      %v907 = vld [vmem:[%s8] sm:$0x1]
      %v909 = vlaneseq
      %v910 = vshrl.u32 %v909, 7
      %v911 = vsub.s32 0, %v910
      %v912 = vrot.slane %v907, %v911
      %v922 = vunpack.c.l.b16 %v899
      %v923 = vunpack.c.l.b16 %v900
      %v924 = vunpack.c.l.b16 %v901
      %v925 = vunpack.c.l.b16 %v902
      %v926 = vunpack.c.l.b16 %v903
      %v927 = vunpack.c.l.b16 %v904
      %v928 = vunpack.c.l.b16 %v905
      %v929 = vunpack.c.l.b16 %v906
      %v930 = vpack.c.b16 %v923, %v922
      %v931 = vpack.c.b16 %v925, %v924
      %v932 = vpack.c.b16 %v927, %v926
      %v933 = vpack.c.b16 %v929, %v928
      %v939 = vsel %vm569, %v891, 0
      %v942 = vsel %vm569, %v892, 0
      %v945 = vsel %vm569, %v893, 0
      %v948 = vsel %vm569, %v894, 0
      %v951 = vsel %vm569, %v895, 0
      %v954 = vsel %vm569, %v896, 0
      %v957 = vsel %vm569, %v897, 0
      %v960 = vsel %vm569, %v898, 0
      %962 = vmatprep.subr.bf16.mxu0 0
      %963 = vmatpush1.bf16.msra.mxu0 0
      %964 = vmatprep.subr.bf16.mxu0 0
      %965 = vmatpush1.bf16.msra.mxu0 0
      %966 = vmatprep.subr.bf16.mxu0 0
      %967 = vmatpush1.bf16.msra.mxu0 0
      %968 = vmatprep.subr.bf16.mxu0 0
      %969 = vmatpush1.bf16.msra.mxu0 0
      %970 = vmatprep.subr.bf16.mxu0 0
      %971 = vmatpush1.bf16.msra.mxu0 %v933
      %972 = vmatprep.subr.bf16.mxu0 0
      %973 = vmatpush1.bf16.msra.mxu0 %v932
      %974 = vmatprep.subr.bf16.mxu0 0
      %975 = vmatpush1.bf16.msra.mxu0 %v931
      %976 = vmatprep.subr.bf16.mxu0 0
      %977 = vmatpush1.bf16.msra.mxu0 %v930
      %978 = vmatprep.subr.bf16.mxu0 0
      %979 = vmatpush2.bf16.msra.mxu0 0
      %980 = vmatprep.subr.bf16.mxu0 0
      %981 = vmatpush2.bf16.msra.mxu0 0
      %982 = vmatprep.subr.bf16.mxu0 0
      %983 = vmatpush2.bf16.msra.mxu0 0
      %984 = vmatprep.subr.bf16.mxu0 0
      %985 = vmatpush2.bf16.msra.mxu0 0
      %986 = vmatprep.subr.bf16.mxu0 0
      %987 = vmatpush2.bf16.msra.mxu0 0
      %988 = vmatprep.subr.bf16.mxu0 0
      %989 = vmatpush2.bf16.msra.mxu0 0
      %990 = vmatprep.subr.bf16.mxu0 0
      %991 = vmatpush2.bf16.msra.mxu0 0
      %992 = vmatprep.subr.bf16.mxu0 0
      %993 = vmatpush2.bf16.msra.mxu0 0
      %994 = vmatprep.mubr.bf16.mxu0 0
      %995 = vmatmul.mubr.bf16.gmra.mxu0 %v939
      %v996 = vpop.f32.mrf.mxu0
      %v997 = vadd.f32 %v912, %v996
      %v998 = vpop.f32.mrf.mxu0
      %v999 = vpop.f32.mrf.mxu0
      %v1000 = vadd.f32 %v912, %v999
      %v1001 = vpop.f32.mrf.mxu0
      %1002 = vmatprep.mubr.bf16.mxu0 0
      %1003 = vmatmul.mubr.bf16.gmra.mxu0 %v942
      %v1004 = vpop.f32.mrf.mxu0
      %v1005 = vadd.f32 %v912, %v1004
      %v1006 = vpop.f32.mrf.mxu0
      %v1007 = vpop.f32.mrf.mxu0
      %v1008 = vadd.f32 %v912, %v1007
      %v1009 = vpop.f32.mrf.mxu0
      %1010 = vmatprep.mubr.bf16.mxu0 0
      %1011 = vmatmul.mubr.bf16.gmra.mxu0 %v945
      %v1012 = vpop.f32.mrf.mxu0
      %v1013 = vadd.f32 %v912, %v1012
      %v1014 = vpop.f32.mrf.mxu0
      %v1015 = vpop.f32.mrf.mxu0
      %v1016 = vadd.f32 %v912, %v1015
      %v1017 = vpop.f32.mrf.mxu0
      %1018 = vmatprep.mubr.bf16.mxu0 0
      %1019 = vmatmul.mubr.bf16.gmra.mxu0 %v948
      %v1020 = vpop.f32.mrf.mxu0
      %v1021 = vadd.f32 %v912, %v1020
      %v1022 = vpop.f32.mrf.mxu0
      %v1023 = vpop.f32.mrf.mxu0
      %v1024 = vadd.f32 %v912, %v1023
      %v1025 = vpop.f32.mrf.mxu0
      %1026 = vmatprep.mubr.bf16.mxu0 0
      %1027 = vmatmul.mubr.bf16.gmra.mxu0 %v951
      %v1028 = vpop.f32.mrf.mxu0
      %v1029 = vadd.f32 %v912, %v1028
      %v1030 = vpop.f32.mrf.mxu0
      %v1031 = vpop.f32.mrf.mxu0
      %v1032 = vadd.f32 %v912, %v1031
      %v1033 = vpop.f32.mrf.mxu0
      %1034 = vmatprep.mubr.bf16.mxu0 0
      %1035 = vmatmul.mubr.bf16.gmra.mxu0 %v954
      %v1036 = vpop.f32.mrf.mxu0
      %v1037 = vadd.f32 %v912, %v1036
      %v1038 = vpop.f32.mrf.mxu0
      %v1039 = vpop.f32.mrf.mxu0
      %v1040 = vadd.f32 %v912, %v1039
      %v1041 = vpop.f32.mrf.mxu0
      %1042 = vmatprep.mubr.bf16.mxu0 0
      %1043 = vmatmul.mubr.bf16.gmra.mxu0 %v957
      %v1044 = vpop.f32.mrf.mxu0
      %v1045 = vadd.f32 %v912, %v1044
      %v1046 = vpop.f32.mrf.mxu0
      %v1047 = vpop.f32.mrf.mxu0
      %v1048 = vadd.f32 %v912, %v1047
      %v1049 = vpop.f32.mrf.mxu0
      %1050 = vmatprep.mubr.bf16.mxu0 0
      %1051 = vmatmul.mubr.bf16.gmra.mxu0 %v960
      %v1052 = vpop.f32.mrf.mxu0
      %v1053 = vadd.f32 %v912, %v1052
      %v1054 = vpop.f32.mrf.mxu0
      %v1055 = vpop.f32.mrf.mxu0
      %v1056 = vadd.f32 %v912, %v1055
      %v1057 = vpop.f32.mrf.mxu0
      %1058 = vdwg.mxu0
      %vm1059 = vcmask 64512
      %v1060 = vsel %vm1059, %v997, -inf
      %1061 = vmax.xlane.f32.xlu0 %v1060
      %v1062 = vpop.xlane.xlu0 %1061
      %v1063 = vsel %vm1059, %v1000, -inf
      %1064 = vmax.xlane.f32.xlu0 %v1063
      %v1065 = vpop.xlane.xlu0 %1064
      %v1066 = vsel %vm1059, %v1005, -inf
      %1067 = vmax.xlane.f32.xlu0 %v1066
      %v1068 = vpop.xlane.xlu0 %1067
      %v1069 = vsel %vm1059, %v1008, -inf
      %1070 = vmax.xlane.f32.xlu0 %v1069
      %v1071 = vpop.xlane.xlu0 %1070
      %v1072 = vsel %vm1059, %v1013, -inf
      %1073 = vmax.xlane.f32.xlu0 %v1072
      %v1074 = vpop.xlane.xlu0 %1073
      %v1075 = vsel %vm1059, %v1016, -inf
      %1076 = vmax.xlane.f32.xlu0 %v1075
      %v1077 = vpop.xlane.xlu0 %1076
      %v1078 = vsel %vm1059, %v1021, -inf
      %1079 = vmax.xlane.f32.xlu0 %v1078
      %v1080 = vpop.xlane.xlu0 %1079
      %v1081 = vsel %vm1059, %v1024, -inf
      %1082 = vmax.xlane.f32.xlu0 %v1081
      %v1083 = vpop.xlane.xlu0 %1082
      %v1084 = vsel %vm1059, %v1029, -inf
      %1085 = vmax.xlane.f32.xlu0 %v1084
      %v1086 = vpop.xlane.xlu0 %1085
      %v1087 = vsel %vm1059, %v1032, -inf
      %1088 = vmax.xlane.f32.xlu0 %v1087
      %v1089 = vpop.xlane.xlu0 %1088
      %v1090 = vsel %vm1059, %v1037, -inf
      %1091 = vmax.xlane.f32.xlu0 %v1090
      %v1092 = vpop.xlane.xlu0 %1091
      %v1093 = vsel %vm1059, %v1040, -inf
      %1094 = vmax.xlane.f32.xlu0 %v1093
      %v1095 = vpop.xlane.xlu0 %1094
      %v1096 = vsel %vm1059, %v1045, -inf
      %1097 = vmax.xlane.f32.xlu0 %v1096
      %v1098 = vpop.xlane.xlu0 %1097
      %v1099 = vsel %vm1059, %v1048, -inf
      %1100 = vmax.xlane.f32.xlu0 %v1099
      %v1101 = vpop.xlane.xlu0 %1100
      %v1102 = vsel %vm1059, %v1053, -inf
      %1103 = vmax.xlane.f32.xlu0 %v1102
      %v1104 = vpop.xlane.xlu0 %1103
      %v1105 = vsel %vm1059, %v1056, -inf
      %1106 = vmax.xlane.f32.xlu0 %v1105
      %v1107 = vpop.xlane.xlu0 %1106
      %v1108 = vsub.f32 %v997, %v1062
      %v1109 = vsub.f32 %v1000, %v1065
      %v1110 = vsub.f32 %v1005, %v1068
      %v1111 = vsub.f32 %v1008, %v1071
      %v1112 = vsub.f32 %v1013, %v1074
      %v1113 = vsub.f32 %v1016, %v1077
      %v1114 = vsub.f32 %v1021, %v1080
      %v1115 = vsub.f32 %v1024, %v1083
      %v1116 = vsub.f32 %v1029, %v1086
      %v1117 = vsub.f32 %v1032, %v1089
      %v1118 = vsub.f32 %v1037, %v1092
      %v1119 = vsub.f32 %v1040, %v1095
      %v1120 = vsub.f32 %v1045, %v1098
      %v1121 = vsub.f32 %v1048, %v1101
      %v1122 = vsub.f32 %v1053, %v1104
      %v1123 = vsub.f32 %v1056, %v1107
      %v1124 = vmul.f32 %v1108, 1.442695
      %v1125 = vpow.pop %v1124
      %v1126 = vmul.f32 %v1109, 1.442695
      %v1127 = vpow.pop %v1126
      %v1128 = vmul.f32 %v1110, 1.442695
      %v1129 = vpow.pop %v1128
      %v1130 = vmul.f32 %v1111, 1.442695
      %v1131 = vpow.pop %v1130
      %v1132 = vmul.f32 %v1112, 1.442695
      %v1133 = vpow.pop %v1132
      %v1134 = vmul.f32 %v1113, 1.442695
      %v1135 = vpow.pop %v1134
      %v1136 = vmul.f32 %v1114, 1.442695
      %v1137 = vpow.pop %v1136
      %v1138 = vmul.f32 %v1115, 1.442695
      %v1139 = vpow.pop %v1138
      %v1140 = vmul.f32 %v1116, 1.442695
      %v1141 = vpow.pop %v1140
      %v1142 = vmul.f32 %v1117, 1.442695
      %v1143 = vpow.pop %v1142
      %v1144 = vmul.f32 %v1118, 1.442695
      %v1145 = vpow.pop %v1144
      %v1146 = vmul.f32 %v1119, 1.442695
      %v1147 = vpow.pop %v1146
      %v1148 = vmul.f32 %v1120, 1.442695
      %v1149 = vpow.pop %v1148
      %v1150 = vmul.f32 %v1121, 1.442695
      %v1151 = vpow.pop %v1150
      %v1152 = vmul.f32 %v1122, 1.442695
      %v1153 = vpow.pop %v1152
      %v1154 = vmul.f32 %v1123, 1.442695
      %v1155 = vpow.pop %v1154
      %v1156 = vsel %vm1059, %v1125, 0.0
      %1157 = vadd.xlane.f32.xlu0 %v1156
      %v1158 = vpop.xlane.xlu0 %1157
      %v1159 = vsel %vm1059, %v1127, 0.0
      %1160 = vadd.xlane.f32.xlu0 %v1159
      %v1161 = vpop.xlane.xlu0 %1160
      %v1162 = vsel %vm1059, %v1129, 0.0
      %1163 = vadd.xlane.f32.xlu0 %v1162
      %v1164 = vpop.xlane.xlu0 %1163
      %v1165 = vsel %vm1059, %v1131, 0.0
      %1166 = vadd.xlane.f32.xlu0 %v1165
      %v1167 = vpop.xlane.xlu0 %1166
      %v1168 = vsel %vm1059, %v1133, 0.0
      %1169 = vadd.xlane.f32.xlu0 %v1168
      %v1170 = vpop.xlane.xlu0 %1169
      %v1171 = vsel %vm1059, %v1135, 0.0
      %1172 = vadd.xlane.f32.xlu0 %v1171
      %v1173 = vpop.xlane.xlu0 %1172
      %v1174 = vsel %vm1059, %v1137, 0.0
      %1175 = vadd.xlane.f32.xlu0 %v1174
      %v1176 = vpop.xlane.xlu0 %1175
      %v1177 = vsel %vm1059, %v1139, 0.0
      %1178 = vadd.xlane.f32.xlu0 %v1177
      %v1179 = vpop.xlane.xlu0 %1178
      %v1180 = vsel %vm1059, %v1141, 0.0
      %1181 = vadd.xlane.f32.xlu0 %v1180
      %v1182 = vpop.xlane.xlu0 %1181
      %v1183 = vsel %vm1059, %v1143, 0.0
      %1184 = vadd.xlane.f32.xlu0 %v1183
      %v1185 = vpop.xlane.xlu0 %1184
      %v1186 = vsel %vm1059, %v1145, 0.0
      %1187 = vadd.xlane.f32.xlu0 %v1186
      %v1188 = vpop.xlane.xlu0 %1187
      %v1189 = vsel %vm1059, %v1147, 0.0
      %1190 = vadd.xlane.f32.xlu0 %v1189
      %v1191 = vpop.xlane.xlu0 %1190
      %v1192 = vsel %vm1059, %v1149, 0.0
      %1193 = vadd.xlane.f32.xlu0 %v1192
      %v1194 = vpop.xlane.xlu0 %1193
      %v1195 = vsel %vm1059, %v1151, 0.0
      %1196 = vadd.xlane.f32.xlu0 %v1195
      %v1197 = vpop.xlane.xlu0 %1196
      %v1198 = vsel %vm1059, %v1153, 0.0
      %1199 = vadd.xlane.f32.xlu0 %v1198
      %v1200 = vpop.xlane.xlu0 %1199
      %v1201 = vsel %vm1059, %v1155, 0.0
      %1202 = vadd.xlane.f32.xlu0 %v1201
      %v1203 = vpop.xlane.xlu0 %1202
      %v1204 = vlog2.pop %v1158
      %v1205 = vmul.f32 %v1204, 0.6931472
      %v1206 = vlog2.pop %v1161
      %v1207 = vmul.f32 %v1206, 0.6931472
      %v1208 = vlog2.pop %v1164
      %v1209 = vmul.f32 %v1208, 0.6931472
      %v1210 = vlog2.pop %v1167
      %v1211 = vmul.f32 %v1210, 0.6931472
      %v1212 = vlog2.pop %v1170
      %v1213 = vmul.f32 %v1212, 0.6931472
      %v1214 = vlog2.pop %v1173
      %v1215 = vmul.f32 %v1214, 0.6931472
      %v1216 = vlog2.pop %v1176
      %v1217 = vmul.f32 %v1216, 0.6931472
      %v1218 = vlog2.pop %v1179
      %v1219 = vmul.f32 %v1218, 0.6931472
      %v1220 = vlog2.pop %v1182
      %v1221 = vmul.f32 %v1220, 0.6931472
      %v1222 = vlog2.pop %v1185
      %v1223 = vmul.f32 %v1222, 0.6931472
      %v1224 = vlog2.pop %v1188
      %v1225 = vmul.f32 %v1224, 0.6931472
      %v1226 = vlog2.pop %v1191
      %v1227 = vmul.f32 %v1226, 0.6931472
      %v1228 = vlog2.pop %v1194
      %v1229 = vmul.f32 %v1228, 0.6931472
      %v1230 = vlog2.pop %v1197
      %v1231 = vmul.f32 %v1230, 0.6931472
      %v1232 = vlog2.pop %v1200
      %v1233 = vmul.f32 %v1232, 0.6931472
      %v1234 = vlog2.pop %v1203
      %v1235 = vmul.f32 %v1234, 0.6931472
      %v1236 = vsub.f32 %v1108, %v1205
      %v1237 = vsub.f32 %v1109, %v1207
      %v1238 = vsub.f32 %v1110, %v1209
      %v1239 = vsub.f32 %v1111, %v1211
      %v1240 = vsub.f32 %v1112, %v1213
      %v1241 = vsub.f32 %v1113, %v1215
      %v1242 = vsub.f32 %v1114, %v1217
      %v1243 = vsub.f32 %v1115, %v1219
      %v1244 = vsub.f32 %v1116, %v1221
      %v1245 = vsub.f32 %v1117, %v1223
      %v1246 = vsub.f32 %v1118, %v1225
      %v1247 = vsub.f32 %v1119, %v1227
      %v1248 = vsub.f32 %v1120, %v1229
      %v1249 = vsub.f32 %v1121, %v1231
      %v1250 = vsub.f32 %v1122, %v1233
      %v1251 = vsub.f32 %v1123, %v1235
      %1252 = vst.msk [vmem:[%s334] sm:$0xff] %vm1059, %v1236
      %1253 = vst.msk [vmem:[%s334 + $0x8] sm:$0xff] %vm1059, %v1237
      %1254 = vst.msk [vmem:[%s334 + $0x10] sm:$0xff] %vm1059, %v1238
      %1255 = vst.msk [vmem:[%s334 + $0x18] sm:$0xff] %vm1059, %v1239
      %1256 = vst.msk [vmem:[%s334 + $0x20] sm:$0xff] %vm1059, %v1240
      %1257 = vst.msk [vmem:[%s334 + $0x28] sm:$0xff] %vm1059, %v1241
      %1258 = vst.msk [vmem:[%s334 + $0x30] sm:$0xff] %vm1059, %v1242
      %1259 = vst.msk [vmem:[%s334 + $0x38] sm:$0xff] %vm1059, %v1243
      %1260 = vst.msk [vmem:[%s334 + $0x40] sm:$0xff] %vm1059, %v1244
      %1261 = vst.msk [vmem:[%s334 + $0x48] sm:$0xff] %vm1059, %v1245
      %1262 = vst.msk [vmem:[%s334 + $0x50] sm:$0xff] %vm1059, %v1246
      %1263 = vst.msk [vmem:[%s334 + $0x58] sm:$0xff] %vm1059, %v1247
      %1264 = vst.msk [vmem:[%s334 + $0x60] sm:$0xff] %vm1059, %v1248
      %1265 = vst.msk [vmem:[%s334 + $0x68] sm:$0xff] %vm1059, %v1249
      %1266 = vst.msk [vmem:[%s334 + $0x70] sm:$0xff] %vm1059, %v1250
      %1267 = vst.msk [vmem:[%s334 + $0x78] sm:$0xff] %vm1059, %v1251
      %s1268 = smul.u32 16, %s20
      %p1269 = scmp.lt.s32.totalorder %s1268, 31
      %s1270 = scalar_select %p1269, %s1268, 31
      %s1271 = smul.addr %s1270, 8
      %s1272 = scalar_lea.vmem %s9, %s1271
      // Predicated region
      $region57: #{net_forward.1} parent=55 // pred_check
        %p1273 = pneg %p232
      $region58: #{net_forward.1} parent=55 // pred_check_branch
        %1275 = sbr.rel (%p1273) target = $region60
      $region59: #{net_forward.1} parent=55 // pred_region
        %s1276 = smul.u32 16, %s20
      $region60: #{net_forward.1} parent=55 // pred_fallthru
        _
    $region56: #{net_forward.1} parent=5 // pred_fallthru
      _
    %p1277 = scmp.le.s32.totalorder 2, %s15
    // Predicated region
    $region61: #{net_forward.1} parent=5 // pred_check
      %p1278 = pneg %p1277
    $region62: #{net_forward.1} parent=5 // pred_check_branch
      %1280 = sbr.rel (%p1278) target = $region64
    $region63: #{net_forward.1} parent=5 // pred_region
      %s1281 = ssub.s32 %s15, 2
      // Predicated region
      $region65: #{net_forward.1} parent=63 // pred_check
        %p1282 = pneg %p238
      $region66: #{net_forward.1} parent=63 // pred_check_branch
        %1284 = sbr.rel (%p1282) target = $region68
      $region67: #{net_forward.1} parent=63 // pred_region
        %s1285 = smul.u32 16, %s21
        %p1286 = scmp.lt.s32.totalorder %s1285, 31
        %s1287 = scalar_select %p1286, %s1285, 31
        %s1288 = smul.addr %s1287, 8
        %s1289 = scalar_lea.vmem %s9, %s1288
      $region68: #{net_forward.1} parent=63 // pred_fallthru
        _
    $region64: #{net_forward.1} parent=5 // pred_fallthru
      _
  $region6: #{net_forward.1} parent=0 // loop_footer
    %s19 = sadd.s32 1, %s15
  $region7: #{net_forward.1} parent=0 // loop_footer_branch
    %14 = sbr.rel target = $region3
  $region8: #{net_forward.1} parent=0 // loop_exit
    _

</llo_original>
